<compile_context>
chip_gen: v7x
topology: tpu7x:2x2x1
jax: 0.10.0
libtpu: 0.0.40
codegen_flags: <defaults>
</compile_context>

<pallas_src>
import functools

import jax
import jax.numpy as jnp
from jax.experimental import pallas as pl
from jax.experimental.pallas import tpu as pltpu


def _round_up(x, m):
    return ((x + m - 1) // m) * m


def _outconv_kernel(x_ref, w_ref, b_ref, o_ref):
    # x_ref: (1, Cin, tHW)   w_ref: (Cout, Cin)   b_ref: (Cout, 1)
    # o_ref: (1, Cout, tHW)
    # Channel counts are tiny, so this op is HBM-bandwidth bound; the dot runs
    # far under the DMA roofline.  Accumulate in f32, store in output dtype.
    acc = jnp.dot(w_ref[...], x_ref[0], preferred_element_type=jnp.float32)
    o_ref[0] = (acc + b_ref[...].astype(jnp.float32)).astype(o_ref.dtype)


@functools.partial(jax.jit, static_argnames=("t_hw_max",))
def out_conv(x, weight, bias, *, t_hw_max=None):
    """1x1 Conv2d forward (PyTorch nn.Conv2d(in_channels, out_channels, 1)).

    x:      (N, Cin, H, W)
    weight: (Cout, Cin, 1, 1)   (PyTorch Conv2d layout)
    bias:   (Cout,)
    returns (N, Cout, H, W), dtype of x.
    """
    N, Cin, H, W = x.shape
    Cout = weight.shape[0]
    HW = H * W
    itemsize = jnp.dtype(x.dtype).itemsize

    # ---- tile-size derivation (memory bound => as big as VMEM allows) ------
    # Live VMEM per step: double-buffered input block (Cin*tHW) + double-
    # buffered output block (Cout*tHW) + tiny resident weight/bias.  Budget is
    # conservative so the same tiles fit v7x's 64 MiB physical VMEM as well as
    # v5e's scoped default, while still being far past the ~512-row knee where
    # per-grid-step overhead stops mattering.
    if t_hw_max is None:
        vmem_budget = 24 * 1024 * 1024
        per_pixel = 2 * (Cin + Cout) * itemsize
        t_hw_max = max(128, (vmem_budget // per_pixel) // 128 * 128)
        t_hw_max = min(t_hw_max, 1 << 18)

    t_hw = min(t_hw_max, _round_up(HW, 128))
    hw_pad = _round_up(HW, t_hw)

    # ---- free-view reshapes; pad the pixel axis only if needed -------------
    x3 = x.reshape(N, Cin, HW)
    if hw_pad != HW:
        x3 = jnp.pad(x3, ((0, 0), (0, 0), (0, hw_pad - HW)))

    w_mat = weight.reshape(Cout, Cin).astype(x.dtype)   # (Cout, Cin)
    b_mat = bias.reshape(Cout, 1).astype(x.dtype)       # (Cout, 1)

    grid = (N, hw_pad // t_hw)

    # Double-buffered in/out blocks with 2x headroom, clamped to a range that
    # is valid across v5e / v6e / v7x.
    block_bytes = (Cin + Cout) * t_hw * itemsize
    vmem_limit = int(min(48 * 1024 * 1024,
                         max(16 * 1024 * 1024, 4 * block_bytes)))

    cost = pl.CostEstimate(
        flops=2 * N * HW * Cin * Cout,
        transcendentals=0,
        bytes_accessed=itemsize * (N * HW * (Cin + Cout) + Cout * Cin + Cout),
    )

    out3 = pl.pallas_call(
        _outconv_kernel,
        out_shape=jax.ShapeDtypeStruct((N, Cout, hw_pad), x.dtype),
        grid_spec=pltpu.PrefetchScalarGridSpec(
            num_scalar_prefetch=0,
            grid=grid,
            in_specs=[
                pl.BlockSpec((1, Cin, t_hw), lambda n, j: (n, 0, j)),   # pixels
                pl.BlockSpec((Cout, Cin), lambda n, j: (0, 0)),          # weight
                pl.BlockSpec((Cout, 1), lambda n, j: (0, 0)),            # bias
            ],
            out_specs=pl.BlockSpec((1, Cout, t_hw), lambda n, j: (n, 0, j)),
        ),
        compiler_params=pltpu.CompilerParams(
            dimension_semantics=("parallel", "parallel"),
            vmem_limit_bytes=vmem_limit,
        ),
        cost_estimate=cost,
    )(x3, w_mat, b_mat)

    # Slice off pixel padding; (N, Cout, HW) -> NCHW is a free reshape.
    return out3[:, :, :HW].reshape(N, Cout, H, W)


def _reference(x, weight, bias):
    Cout, Cin = weight.shape[0], weight.shape[1]
    ref = jnp.einsum("nchw,oc->nohw", x, weight.reshape(Cout, Cin))
    return ref + bias[None, :, None, None]


if __name__ == "__main__":
    in_channels, out_channels = 4, 3
    N, H, W = 2, 16, 16

    key = jax.random.PRNGKey(0)
    kx, kw, kb = jax.random.split(key, 3)

    x = jax.random.normal(kx, (N, in_channels, H, W), dtype=jnp.float32)
    # Deterministic synthetic params with the shapes nn.Conv2d(in, out, 1) uses.
    weight = jax.random.normal(
        kw, (out_channels, in_channels, 1, 1), dtype=jnp.float32) * 0.1
    bias = jax.random.normal(kb, (out_channels,), dtype=jnp.float32) * 0.1

    y = out_conv(x, weight, bias)
    jax.block_until_ready(y)
    assert y.shape == (N, out_channels, H, W)
    assert jnp.allclose(y, _reference(x, weight, bias), atol=1e-5, rtol=1e-5)

    # Non-multiple-of-128 spatial size exercises the padded tail path.
    x2 = jax.random.normal(kx, (N, in_channels, 13, 9), dtype=jnp.float32)
    y2 = out_conv(x2, weight, bias)
    jax.block_until_ready(y2)
    assert y2.shape == (N, out_channels, 13, 9)
    assert jnp.allclose(y2, _reference(x2, weight, bias), atol=1e-5, rtol=1e-5)

    print("KERNEL_OK")
</pallas_src>

<mosaic_0001>
module attributes {stable_mosaic.version = 11 : i64} {
  func.func @_outconv_kernel(%arg0: i32, %arg1: i32, %arg2: memref<1x4x256xf32, #tpu.memory_space<vmem>>, %arg3: memref<3x4xf32, #tpu.memory_space<vmem>>, %arg4: memref<3x1xf32, #tpu.memory_space<vmem>>, %arg5: memref<1x3x256xf32, #tpu.memory_space<vmem>>) attributes {dimension_semantics = [#tpu.dimension_semantics<parallel>, #tpu.dimension_semantics<parallel>], iteration_bounds = array<i64: 2, 1>, scalar_prefetch = 0 : i64, scratch_operands = 0 : i64, tpu.core_type = #tpu.core_type<tc>, window_params = [{transform_indices = @transform_0, window_bounds = array<i64: 1, 4, 256>}, {pipeline_mode = #tpu.pipeline_mode<synchronous>, transform_indices = @transform_1, window_bounds = array<i64: 3, 4>}, {pipeline_mode = #tpu.pipeline_mode<synchronous>, transform_indices = @transform_2, window_bounds = array<i64: 3, 1>}, {transform_indices = @transform_3, window_bounds = array<i64: 1, 3, 256>}]} {
    %c0 = arith.constant 0 : index
    %c0_0 = arith.constant 0 : index
    %0 = vector.load %arg3[%c0, %c0_0] : memref<3x4xf32, #tpu.memory_space<vmem>>, vector<3x4xf32>
    %c0_1 = arith.constant 0 : index
    %c0_2 = arith.constant 0 : index
    %c0_3 = arith.constant 0 : index
    %1 = vector.load %arg2[%c0_1, %c0_2, %c0_3] : memref<1x4x256xf32, #tpu.memory_space<vmem>>, vector<1x4x256xf32>
    %2 = vector.shape_cast %1 : vector<1x4x256xf32> to vector<4x256xf32>
    %cst = arith.constant dense<0.000000e+00> : vector<3x256xf32>
    %3 = tpu.matmul %0, %2, %cst {dimension_numbers = #tpu.dot_dimension_numbers<[1], [0], [0], [1], [0, 0, 1, 1], [], []>} : vector<3x4xf32>, vector<4x256xf32>, vector<3x256xf32> -> vector<3x256xf32>
    %c0_4 = arith.constant 0 : index
    %c0_5 = arith.constant 0 : index
    %4 = vector.load %arg4[%c0_4, %c0_5] : memref<3x1xf32, #tpu.memory_space<vmem>>, vector<3x1xf32>
    %5 = vector.broadcast %4 : vector<3x1xf32> to vector<3x256xf32>
    %6 = arith.addf %3, %5 : vector<3x256xf32>
    %c0_6 = arith.constant 0 : index
    %c0_7 = arith.constant 0 : index
    %c0_8 = arith.constant 0 : index
    %7 = vector.load %arg5[%c0_6, %c0_7, %c0_8] : memref<1x3x256xf32, #tpu.memory_space<vmem>>, vector<1x3x256xf32>
    %8 = vector.shape_cast %7 : vector<1x3x256xf32> to vector<3x256xf32>
    %9 = vector.shape_cast %6 : vector<3x256xf32> to vector<1x3x256xf32>
    tpu.vector_store %arg5[%c0_6, %c0_7, %c0_8], %9 {strides = array<i32>} : memref<1x3x256xf32, #tpu.memory_space<vmem>>, vector<1x3x256xf32>,
    return
  }
  func.func @transform_0(%arg0: i32, %arg1: i32) -> (i32, i32, i32) {
    %c0_i32 = arith.constant 0 : i32
    %c0_i32_0 = arith.constant 0 : i32
    return %arg0, %c0_i32, %arg1 : i32, i32, i32
  }
  func.func @transform_1(%arg0: i32, %arg1: i32) -> (i32, i32) {
    %c0_i32 = arith.constant 0 : i32
    %c0_i32_0 = arith.constant 0 : i32
    %c0_i32_1 = arith.constant 0 : i32
    return %c0_i32, %c0_i32_0 : i32, i32
  }
  func.func @transform_2(%arg0: i32, %arg1: i32) -> (i32, i32) {
    %c0_i32 = arith.constant 0 : i32
    %c0_i32_0 = arith.constant 0 : i32
    %c0_i32_1 = arith.constant 0 : i32
    return %c0_i32, %c0_i32_0 : i32, i32
  }
  func.func @transform_3(%arg0: i32, %arg1: i32) -> (i32, i32, i32) {
    %c0_i32 = arith.constant 0 : i32
    %c0_i32_0 = arith.constant 0 : i32
    return %arg0, %c0_i32, %arg1 : i32, i32, i32
  }
}

</mosaic_0001>

<llo_original>
// kernel: out_conv.1
$region0: #{out_conv.1}
  #allocation0 [shape = 'u32[]', space=smem, size = 0x4, offset = 0x4, fixed_abs, tag = 'smem constant byte address 0x4 - core index']
  #allocation1 [shape = 'u32[144,128]{1,0:T(1,128)}', space=vmem, size = 0x12000, scoped, tag = 'internal scratch']
  %s0 = inlined_call_operand.vmem [shape: f32[2,4,256], index: 0, kind: input, shape index: {}]
  %s1 = inlined_call_operand.vmem [shape: f32[3,4], index: 1, kind: input, shape index: {}]
  %s2 = inlined_call_operand.vmem [shape: f32[3,1], index: 2, kind: input, shape index: {}]
  %s3 = inlined_call_operand.vmem [shape: f32[2,3,256], index: 3, kind: output, shape index: {}]
  %s4 = sld [smem:[#allocation0]]
  $region45: #{out_conv.1} parent=0
    _
  %s6 = ssub.s32 1, %s4
  %s7 = scalar_select 0, %s6, %s4
  loop: start=0, step=1, limit=4
  $region2: #{out_conv.1} parent=0 // loop_pre_header
    _
  $region3: #{out_conv.1} parent=0 // loop_header
    %s9 = sphi 0, %s13
    %p10 = scmp.ge.s32.totalorder %s9, 4
    %s16 = sphi 0, %s28
    %s17 = sphi 0, %s24
    %s18 = sphi 0, %s16
    %s19 = sphi 0, %s17
    %s20 = sphi 0, %s18
    %s21 = sphi 0, %s19
    %s33 = sphi 0, %s35
    %s36 = sphi 0, %s33
    %s37 = sphi 0, %s36
    %s53 = sphi 0, %s37
    %s57 = sphi 0, %s57
    %s59 = sphi 0, %s57
    %s60 = sphi 0, %s59
    %s74 = sphi 0, %s60
    %s78 = sphi 0, %s78
    %s80 = sphi 0, %s78
    %s81 = sphi 0, %s80
    %s95 = sphi 0, %s81
    %s103 = sphi 0, %s105
    %s106 = sphi 0, %s103
    %s107 = sphi 0, %s106
    %s123 = sphi 0, %s107
  $region4: #{out_conv.1} parent=0 // loop_header_branch
    %12 = sbr.rel (%p10) target = $region8
  $region5: #{out_conv.1} parent=0 // loop_body
    %s14 = ssub.s32 %s9, 1
    %s15 = ssub.s32 %s9, 2
    %s22 = sadd.s32 1, %s17
    %p23 = scmp.ge.s32.totalorder %s22, 1
    %s24 = scalar_select %p23, 0, %s22
    %s25 = sadd.s32 1, %s16
    %s26 = scalar_select %p23, %s25, %s16
    %p27 = scmp.ge.s32.totalorder %s26, 2
    %s28 = scalar_select %p27, 0, %s26
    %s29 = ssub.s32 %s16, %s28
    %s30 = ssub.s32 %s17, %s24
    %s31 = sor.u32 %s29, %s30
    %p32 = scmp.eq.s32.totalorder %s31, 0
    %s34 = sadd.s32 %s33, 1
    %s35 = scalar_select %p32, %s33, %s34
    %p38 = pneg %p32
    %p39 = scmp.eq.s32.totalorder %s9, 1
    %p40 = por %p38, %p39
    %p41 = scmp.ne.s32.totalorder %s33, %s36
    %p42 = scmp.eq.s32.totalorder %s9, 0
    %p43 = por %p41, %p42
    %p44 = scmp.ne.s32.totalorder %s33, %s36
    %p45 = scmp.eq.s32.totalorder %s14, 1
    %p46 = por %p44, %p45
    %p47 = scmp.ne.s32.totalorder %s36, %s37
    %p48 = scmp.eq.s32.totalorder %s14, 0
    %p49 = por %p47, %p48
    %p50 = scmp.ne.s32.totalorder %s36, %s37
    %p51 = scmp.eq.s32.totalorder %s15, 1
    %p52 = por %p50, %p51
    %p54 = scmp.ne.s32.totalorder %s37, %s53
    %p55 = scmp.eq.s32.totalorder %s15, 0
    %p56 = por %p54, %p55
    %s58 = sadd.s32 %s57, 1
    %p61 = scmp.eq.s32.totalorder %s9, 1
    %p62 = scmp.ne.s32.totalorder %s57, %s59
    %p63 = scmp.eq.s32.totalorder %s9, 0
    %p64 = por %p62, %p63
    %p65 = scmp.ne.s32.totalorder %s57, %s59
    %p66 = scmp.eq.s32.totalorder %s14, 1
    %p67 = por %p65, %p66
    %p68 = scmp.ne.s32.totalorder %s59, %s60
    %p69 = scmp.eq.s32.totalorder %s14, 0
    %p70 = por %p68, %p69
    %p71 = scmp.ne.s32.totalorder %s59, %s60
    %p72 = scmp.eq.s32.totalorder %s15, 1
    %p73 = por %p71, %p72
    %p75 = scmp.ne.s32.totalorder %s60, %s74
    %p76 = scmp.eq.s32.totalorder %s15, 0
    %p77 = por %p75, %p76
    %s79 = sadd.s32 %s78, 1
    %p82 = scmp.eq.s32.totalorder %s9, 1
    %p83 = scmp.ne.s32.totalorder %s78, %s80
    %p84 = scmp.eq.s32.totalorder %s9, 0
    %p85 = por %p83, %p84
    %p86 = scmp.ne.s32.totalorder %s78, %s80
    %p87 = scmp.eq.s32.totalorder %s14, 1
    %p88 = por %p86, %p87
    %p89 = scmp.ne.s32.totalorder %s80, %s81
    %p90 = scmp.eq.s32.totalorder %s14, 0
    %p91 = por %p89, %p90
    %p92 = scmp.ne.s32.totalorder %s80, %s81
    %p93 = scmp.eq.s32.totalorder %s15, 1
    %p94 = por %p92, %p93
    %p96 = scmp.ne.s32.totalorder %s81, %s95
    %p97 = scmp.eq.s32.totalorder %s15, 0
    %p98 = por %p96, %p97
    %s99 = ssub.s32 %s16, %s28
    %s100 = ssub.s32 %s17, %s24
    %s101 = sor.u32 %s99, %s100
    %p102 = scmp.eq.s32.totalorder %s101, 0
    %s104 = sadd.s32 %s103, 1
    %s105 = scalar_select %p102, %s103, %s104
    %p108 = pneg %p102
    %p109 = scmp.eq.s32.totalorder %s9, 1
    %p110 = por %p108, %p109
    %p111 = scmp.ne.s32.totalorder %s103, %s106
    %p112 = scmp.eq.s32.totalorder %s9, 0
    %p113 = por %p111, %p112
    %p114 = scmp.ne.s32.totalorder %s103, %s106
    %p115 = scmp.eq.s32.totalorder %s14, 1
    %p116 = por %p114, %p115
    %p117 = scmp.ne.s32.totalorder %s106, %s107
    %p118 = scmp.eq.s32.totalorder %s14, 0
    %p119 = por %p117, %p118
    %p120 = scmp.ne.s32.totalorder %s106, %s107
    %p121 = scmp.eq.s32.totalorder %s15, 1
    %p122 = por %p120, %p121
    %p124 = scmp.ne.s32.totalorder %s107, %s123
    %p125 = scmp.eq.s32.totalorder %s15, 0
    %p126 = por %p124, %p125
    %p127 = scmp.le.s32.totalorder 1, %s9
    %p128 = scmp.lt.s32.totalorder %s9, 3
    %p129 = pnand %p127, %p128
    %p130 = pneg %p129
    // Predicated region
    $region9: #{out_conv.1} parent=5 // pred_check
      _
    $region10: #{out_conv.1} parent=5 // pred_check_branch
      %132 = sbr.rel (%p129) target = $region12
    $region11: #{out_conv.1} parent=5 // pred_region
      %s133 = ssub.s32 %s9, 1
      // Predicated region
      $region13: #{out_conv.1} parent=11 // pred_check
        %p134 = pneg %p70
      $region14: #{out_conv.1} parent=11 // pred_check_branch
        %136 = sbr.rel (%p134) target = $region16
      $region15: #{out_conv.1} parent=11 // pred_region
        _
      $region16: #{out_conv.1} parent=11 // pred_fallthru
        _
      // Predicated region
      $region17: #{out_conv.1} parent=11 // pred_check
        %p137 = pneg %p91
      $region18: #{out_conv.1} parent=11 // pred_check_branch
        %139 = sbr.rel (%p137) target = $region20
      $region19: #{out_conv.1} parent=11 // pred_region
        _
      $region20: #{out_conv.1} parent=11 // pred_fallthru
        _
    $region12: #{out_conv.1} parent=5 // pred_fallthru
      _
    %p140 = scmp.lt.s32.totalorder %s9, 2
    // Predicated region
    $region21: #{out_conv.1} parent=5 // pred_check
      %p141 = pneg %p140
    $region22: #{out_conv.1} parent=5 // pred_check_branch
      %143 = sbr.rel (%p141) target = $region24
    $region23: #{out_conv.1} parent=5 // pred_region
      // Predicated region
      $region25: #{out_conv.1} parent=23 // pred_check
        %p144 = pneg %p43
      $region26: #{out_conv.1} parent=23 // pred_check_branch
        %146 = sbr.rel (%p144) target = $region28
      $region27: #{out_conv.1} parent=23 // pred_region
        %s147 = smul.u32 2, %s17
        %p148 = scmp.lt.s32.totalorder %s16, 1
        %s149 = scalar_select %p148, %s16, 1
        %p150 = scmp.lt.s32.totalorder %s147, 1
        %s151 = scalar_select %p150, %s147, 1
        %s152 = smul.addr %s149, 2
        %s153 = sadd.s32 %s151, %s152
        %s154 = smul.addr %s153, 4
        %s155 = scalar_lea.vmem %s0, %s154
        %s156 = smul.u32 2, %s17
      $region28: #{out_conv.1} parent=23 // pred_fallthru
        _
    $region24: #{out_conv.1} parent=5 // pred_fallthru
      _
    %p157 = scmp.le.s32.totalorder 1, %s9
    %p158 = scmp.lt.s32.totalorder %s9, 3
    %p159 = pnand %p157, %p158
    %p160 = pneg %p159
    // Predicated region
    $region29: #{out_conv.1} parent=5 // pred_check
      _
    $region30: #{out_conv.1} parent=5 // pred_check_branch
      %162 = sbr.rel (%p159) target = $region32
    $region31: #{out_conv.1} parent=5 // pred_region
      %s163 = ssub.s32 %s9, 1
      %s164 = smul.u32 2, %s19
      %p165 = scmp.lt.s32.totalorder %s18, 1
      %s166 = scalar_select %p165, %s18, 1
      %p167 = scmp.lt.s32.totalorder %s164, 1
      %s168 = scalar_select %p167, %s164, 1
      %s169 = smul.addr %s166, 2
      %s170 = sadd.s32 %s168, %s169
      %s171 = smul.addr %s170, 4
      %s172 = scalar_lea.vmem %s0, %s171
      %p173 = pneg %p49
      %p174 = pneg %p46
      %p175 = pneg %p70
      %p176 = pneg %p67
      %p177 = pneg %p91
      %p178 = pneg %p88
      %p179 = pneg %p119
      %p180 = pneg %p116
      %s181 = smul.u32 2, %s19
      %p182 = scmp.lt.s32.totalorder %s18, 1
      %s183 = scalar_select %p182, %s18, 1
      %p184 = scmp.lt.s32.totalorder %s181, 1
      %s185 = scalar_select %p184, %s181, 1
      %s186 = smul.addr %s183, 2
      %s187 = sadd.s32 %s185, %s186
      %s188 = smul.addr %s187, 4
      %s189 = scalar_lea.vmem %s3, %s188
      %s190 = smul.u32 2, %s19
      %p191 = scmp.lt.s32.totalorder %s18, 1
      %s192 = scalar_select %p191, %s18, 1
      %p193 = scmp.lt.s32.totalorder %s190, 1
      %s194 = scalar_select %p193, %s190, 1
      %s195 = smul.addr %s192, 2
      %s196 = sadd.s32 %s194, %s195
      %s197 = smul.addr %s196, 4
      %s198 = scalar_lea.vmem %s0, %s197
      %s199 = smul.u32 2, %s19
      %s200 = smul.u32 2, %s19
      %p201 = scmp.lt.s32.totalorder %s18, 1
      %s202 = scalar_select %p201, %s18, 1
      %p203 = scmp.lt.s32.totalorder %s200, 1
      %s204 = scalar_select %p203, %s200, 1
      %s205 = smul.addr %s202, 2
      %s206 = sadd.s32 %s204, %s205
      %s207 = smul.addr %s206, 4
      %s208 = scalar_lea.vmem %s3, %s207
      %s209 = smul.u32 2, %s19
      %v210 = vld [vmem:[%s1] sm:$0x7]
      %v211 = vld [vmem:[%s198] sm:$0xff]
      %v212 = vld [vmem:[%s2] sm:$0x7]
      %214 = vset.pattern.permute.xlu0 0
      %215 = vperm.xlu0 %214, %v212
      %v216 = vpop.permute.xlu0 %215
      %v219 = vcombine.high %v211, %v211
      %vm220 = vcmask 31744
      %v222 = vsel %vm220, %v210, 0
      %vm224 = vcmask 1043456
      %v225 = vsel %vm224, %v211, 0
      %v227 = vsel %vm224, %v219, 0
      %229 = vmatprep.subr.mxu0 %v227
      %230 = vmatpush1.msra.mxu0 %v225
      %231 = vmatprep.subr.mxu0 0.0
      %232 = vmatpush1.msra.mxu0 0.0
      %233 = vmatprep.subr.mxu0 0.0
      %234 = vmatpush1.msra.mxu0 0.0
      %235 = vmatprep.subr.mxu0 0.0
      %236 = vmatpush1.msra.mxu0 0.0
      %237 = vmatprep.subr.mxu0 0.0
      %238 = vmatpush1.msra.mxu0 0.0
      %239 = vmatprep.subr.mxu0 0.0
      %240 = vmatpush1.msra.mxu0 0.0
      %241 = vmatprep.subr.mxu0 0.0
      %242 = vmatpush1.msra.mxu0 0.0
      %243 = vmatprep.subr.mxu0 0.0
      %244 = vmatpush1.msra.mxu0 0.0
      %245 = vmatprep.subr.mxu0 0.0
      %246 = vmatpush1.msra.mxu0 0.0
      %247 = vmatprep.subr.mxu0 0.0
      %248 = vmatpush1.msra.mxu0 0.0
      %249 = vmatprep.subr.mxu0 0.0
      %250 = vmatpush1.msra.mxu0 0.0
      %251 = vmatprep.subr.mxu0 0.0
      %252 = vmatpush1.msra.mxu0 0.0
      %253 = vmatprep.subr.mxu0 0.0
      %254 = vmatpush1.msra.mxu0 0.0
      %255 = vmatprep.subr.mxu0 0.0
      %256 = vmatpush1.msra.mxu0 0.0
      %257 = vmatprep.subr.mxu0 0.0
      %258 = vmatpush1.msra.mxu0 0.0
      %259 = vmatprep.subr.mxu0 0.0
      %260 = vmatpush1.msra.mxu0 0.0
      %261 = vmatprep.subr.mxu0 0.0
      %262 = vmatpush1.msra.mxu0 0.0
      %263 = vmatprep.subr.mxu0 0.0
      %264 = vmatpush1.msra.mxu0 0.0
      %265 = vmatprep.subr.mxu0 0.0
      %266 = vmatpush1.msra.mxu0 0.0
      %267 = vmatprep.subr.mxu0 0.0
      %268 = vmatpush1.msra.mxu0 0.0
      %269 = vmatprep.subr.mxu0 0.0
      %270 = vmatpush1.msra.mxu0 0.0
      %271 = vmatprep.subr.mxu0 0.0
      %272 = vmatpush1.msra.mxu0 0.0
      %273 = vmatprep.subr.mxu0 0.0
      %274 = vmatpush1.msra.mxu0 0.0
      %275 = vmatprep.subr.mxu0 0.0
      %276 = vmatpush1.msra.mxu0 0.0
      %277 = vmatprep.subr.mxu0 0.0
      %278 = vmatpush1.msra.mxu0 0.0
      %279 = vmatprep.subr.mxu0 0.0
      %280 = vmatpush1.msra.mxu0 0.0
      %281 = vmatprep.subr.mxu0 0.0
      %282 = vmatpush1.msra.mxu0 0.0
      %283 = vmatprep.subr.mxu0 0.0
      %284 = vmatpush1.msra.mxu0 0.0
      %285 = vmatprep.subr.mxu0 0.0
      %286 = vmatpush1.msra.mxu0 0.0
      %287 = vmatprep.subr.mxu0 0.0
      %288 = vmatpush1.msra.mxu0 0.0
      %289 = vmatprep.subr.mxu0 0.0
      %290 = vmatpush1.msra.mxu0 0.0
      %291 = vmatprep.subr.mxu0 0.0
      %292 = vmatpush1.msra.mxu0 0.0
      %293 = vmatprep.mubr.f32.mxu0 0.0
      %294 = vmatmul.mubr.f32.gmra.mrb[0].mxu0 %v222
      %v295 = vpop.f32.mrb[0].mxu0
      %v296 = vadd.f32 %v216, %v295
      %v297 = vpop.f32.mrb[0].mxu0
      %v298 = vadd.f32 %v216, %v297
      %299 = vdwg.mxu0
      %v302 = vcombine.low %v296, %v298
      %304 = vst [vmem:[%s208] sm:$0x77] %v302
      %s305 = smul.u32 2, %s19
      %p306 = scmp.lt.s32.totalorder %s18, 1
      %s307 = scalar_select %p306, %s18, 1
      %p308 = scmp.lt.s32.totalorder %s305, 1
      %s309 = scalar_select %p308, %s305, 1
      %s310 = smul.addr %s307, 2
      %s311 = sadd.s32 %s309, %s310
      %s312 = smul.addr %s311, 4
      %s313 = scalar_lea.vmem %s3, %s312
      // Predicated region
      $region33: #{out_conv.1} parent=31 // pred_check
        %p314 = pneg %p116
      $region34: #{out_conv.1} parent=31 // pred_check_branch
        %316 = sbr.rel (%p314) target = $region36
      $region35: #{out_conv.1} parent=31 // pred_region
        %s317 = smul.u32 2, %s19
      $region36: #{out_conv.1} parent=31 // pred_fallthru
        _
    $region32: #{out_conv.1} parent=5 // pred_fallthru
      _
    %p318 = scmp.le.s32.totalorder 2, %s9
    // Predicated region
    $region37: #{out_conv.1} parent=5 // pred_check
      %p319 = pneg %p318
    $region38: #{out_conv.1} parent=5 // pred_check_branch
      %321 = sbr.rel (%p319) target = $region40
    $region39: #{out_conv.1} parent=5 // pred_region
      %s322 = ssub.s32 %s9, 2
      // Predicated region
      $region41: #{out_conv.1} parent=39 // pred_check
        %p323 = pneg %p122
      $region42: #{out_conv.1} parent=39 // pred_check_branch
        %325 = sbr.rel (%p323) target = $region44
      $region43: #{out_conv.1} parent=39 // pred_region
        %s326 = smul.u32 2, %s21
        %p327 = scmp.lt.s32.totalorder %s20, 1
        %s328 = scalar_select %p327, %s20, 1
        %p329 = scmp.lt.s32.totalorder %s326, 1
        %s330 = scalar_select %p329, %s326, 1
        %s331 = smul.addr %s328, 2
        %s332 = sadd.s32 %s330, %s331
        %s333 = smul.addr %s332, 4
        %s334 = scalar_lea.vmem %s3, %s333
      $region44: #{out_conv.1} parent=39 // pred_fallthru
        _
    $region40: #{out_conv.1} parent=5 // pred_fallthru
      _
  $region6: #{out_conv.1} parent=0 // loop_footer
    %s13 = sadd.s32 1, %s9
  $region7: #{out_conv.1} parent=0 // loop_footer_branch
    %8 = sbr.rel target = $region3
  $region8: #{out_conv.1} parent=0 // loop_exit
    _

</llo_original>
